<compile_context>
chip_gen: v7x
topology: tpu7x:2x2x1
jax: 0.10.0
libtpu: 0.0.40
codegen_flags: <defaults>
</compile_context>

<pallas_src>
import numpy as np
import jax
import jax.numpy as jnp
from jax.experimental import pallas as pl
from jax.experimental.pallas import tpu as pltpu

MAX_LEN = 1000   # max_len default of the module
INPUT_DIM = 32   # hidden size used in the demo

_LANE = 128                      # vreg lane width
_SUBLANE = 8                     # vreg sublanes (f32)
_TARGET_BLOCK_BYTES = 2 * 1024 * 1024   # per-activation-block VMEM budget


# -----------------------------------------------------------------------------
# Positional table, identical to the PyTorch __init__ construction.
# -----------------------------------------------------------------------------
def make_positional_table(max_len: int, d: int) -> jnp.ndarray:
    pos = jnp.arange(max_len, dtype=jnp.float32)[:, None]                 # (L, 1)
    div = jnp.power(10000.0,
                    jnp.arange(0, d, 2, dtype=jnp.float32) / float(d))    # (ceil(d/2),)
    X = pos / div                                                         # (L, ceil(d/2))
    P = jnp.zeros((max_len, d), jnp.float32)
    P = P.at[:, 0::2].set(jnp.sin(X))
    P = P.at[:, 1::2].set(jnp.cos(X[:, : d // 2]))
    return P[None]                                                        # (1, L, d)


# -----------------------------------------------------------------------------
# Kernel: out = x + P   (P broadcast over the batch-tile sublanes)
#   x block : (tb, ts)  lane-dense activation tile
#   P block : (1,  ts)  shared positional slab
# -----------------------------------------------------------------------------
def pe_add_kernel(x_ref, p_ref, o_ref):
    # Accumulate in f32 regardless of activation dtype (v5e VPU has no bf16);
    # the casts are free VPU filler under the HBM bottleneck.
    o_ref[...] = (x_ref[...].astype(jnp.float32) + p_ref[...]).astype(o_ref.dtype)


# -----------------------------------------------------------------------------
# VMEM-budgeted tile selection for the flattened (B, S*D) slab.
# -----------------------------------------------------------------------------
def _choose_tiles(b: int, sd: int, itemsize: int):
    target_elems = max(_SUBLANE * _LANE, _TARGET_BLOCK_BYTES // itemsize)

    # Lane tile: largest multiple of 128 such that an 8-row block still fits the
    # budget; ragged lane tails are handled by the cdiv grid (masked stores only
    # on the final column block).
    max_ts = max(_LANE, ((target_elems // _SUBLANE) // _LANE) * _LANE)
    ts = sd if sd <= max_ts else max_ts

    # Sublane (batch) tile: multiple of 8 filling the budget; full batch when B<8.
    if b < _SUBLANE:
        tb = b
    else:
        tb = (min(max(target_elems // ts, _SUBLANE), b) // _SUBLANE) * _SUBLANE
        tb = max(_SUBLANE, min(tb, (b // _SUBLANE) * _SUBLANE))
        # Guarantee >= 2 grid steps when the batch is splittable so both v7x
        # TensorCores stream HBM (no-op on single-TC v5e/v6e).
        if (-(-b // tb)) * (-(-sd // ts)) == 1 and b >= 2 * _SUBLANE:
            tb = max(_SUBLANE, ((b // 2) // _SUBLANE) * _SUBLANE)
    return tb, ts


# -----------------------------------------------------------------------------
# Wrapper
# -----------------------------------------------------------------------------
def positional_encoding_forward(inputs: jnp.ndarray,
                                p_table: jnp.ndarray) -> jnp.ndarray:
    """inputs: (B, S, D); p_table: (1, max_len, D) f32. Returns (B, S, D)."""
    B, S, D = inputs.shape
    sd = S * D

    # Lane-dense 2-D slabs (contiguous reshape = free layout change).
    x_flat = inputs.reshape(B, sd)
    p_flat = p_table[:, :S, :].reshape(1, sd).astype(jnp.float32)

    tb, ts = _choose_tiles(B, sd, jnp.dtype(inputs.dtype).itemsize)
    grid = (pl.cdiv(B, tb), pl.cdiv(sd, ts))

    out_flat = pl.pallas_call(
        pe_add_kernel,
        out_shape=jax.ShapeDtypeStruct((B, sd), inputs.dtype),
        grid_spec=pltpu.PrefetchScalarGridSpec(
            num_scalar_prefetch=0,
            grid=grid,
            in_specs=[
                pl.BlockSpec((tb, ts), lambda i, j: (i, j)),   # activation tile
                pl.BlockSpec((1, ts), lambda i, j: (0, j)),    # shared P slab
            ],
            out_specs=pl.BlockSpec((tb, ts), lambda i, j: (i, j)),
        ),
        compiler_params=pltpu.CompilerParams(
            dimension_semantics=("parallel", "parallel")),
    )(x_flat, p_flat)

    # Dropout p = 0.0 (module default / eval mode) is the identity.
    # TODO(synk): training-mode dropout (p > 0) would need pltpu.prng_* masking;
    # omitted because the module default is p = 0.0.
    return out_flat.reshape(B, S, D)


# -----------------------------------------------------------------------------
if __name__ == "__main__":
    key = jax.random.PRNGKey(0)
    p_table = make_positional_table(MAX_LEN, INPUT_DIM)   # (1, 1000, 32), built once

    # (1) Small shape implied by the module (B=4, S=8, D=32), f32.
    B, S, D = 4, 8, INPUT_DIM
    x = jax.random.normal(key, (B, S, D), jnp.float32)
    out = jax.block_until_ready(positional_encoding_forward(x, p_table))
    ref = x + p_table[:, :S, :]
    np.testing.assert_allclose(np.asarray(out), np.asarray(ref), rtol=1e-6, atol=1e-6)

    # (2) Multi-step grid + ragged (B % 8 != 0, S*D % 128 != 0) path.
    B2, S2 = 20, 7
    x2 = jax.random.normal(jax.random.fold_in(key, 1), (B2, S2, INPUT_DIM), jnp.float32)
    out2 = jax.block_until_ready(positional_encoding_forward(x2, p_table))
    ref2 = x2 + p_table[:, :S2, :]
    np.testing.assert_allclose(np.asarray(out2), np.asarray(ref2), rtol=1e-6, atol=1e-6)

    # (3) bf16 activations (in-kernel f32 add, bf16 store), >=2 batch grid steps.
    B3, S3 = 64, 16
    x3 = jax.random.normal(jax.random.fold_in(key, 2), (B3, S3, INPUT_DIM), jnp.bfloat16)
    out3 = jax.block_until_ready(positional_encoding_forward(x3, p_table))
    ref3 = (x3.astype(jnp.float32) + p_table[:, :S3, :]).astype(jnp.bfloat16)
    np.testing.assert_allclose(np.asarray(out3, dtype=np.float32),
                               np.asarray(ref3, dtype=np.float32),
                               rtol=1e-2, atol=1e-2)

    print("KERNEL_OK")
</pallas_src>

<mosaic_0001>
module attributes {stable_mosaic.version = 11 : i64} {
  func.func @pe_add_kernel(%arg0: i32, %arg1: i32, %arg2: memref<4x256xf32, #tpu.memory_space<vmem>>, %arg3: memref<1x256xf32, #tpu.memory_space<vmem>>, %arg4: memref<4x256xf32, #tpu.memory_space<vmem>>) attributes {dimension_semantics = [#tpu.dimension_semantics<parallel>, #tpu.dimension_semantics<parallel>], iteration_bounds = array<i64: 1, 1>, scalar_prefetch = 0 : i64, scratch_operands = 0 : i64, tpu.core_type = #tpu.core_type<tc>, window_params = [{transform_indices = @transform_0, window_bounds = array<i64: 4, 256>}, {transform_indices = @transform_1, window_bounds = array<i64: 1, 256>}, {transform_indices = @transform_2, window_bounds = array<i64: 4, 256>}]} {
    %c0 = arith.constant 0 : index
    %c0_0 = arith.constant 0 : index
    %0 = vector.load %arg2[%c0, %c0_0] : memref<4x256xf32, #tpu.memory_space<vmem>>, vector<4x256xf32>
    %c0_1 = arith.constant 0 : index
    %c0_2 = arith.constant 0 : index
    %1 = vector.load %arg3[%c0_1, %c0_2] : memref<1x256xf32, #tpu.memory_space<vmem>>, vector<1x256xf32>
    %2 = vector.broadcast %1 : vector<1x256xf32> to vector<4x256xf32>
    %3 = arith.addf %0, %2 : vector<4x256xf32>
    %c0_3 = arith.constant 0 : index
    %c0_4 = arith.constant 0 : index
    %4 = vector.load %arg4[%c0_3, %c0_4] : memref<4x256xf32, #tpu.memory_space<vmem>>, vector<4x256xf32>
    tpu.vector_store %arg4[%c0_3, %c0_4], %3 {strides = array<i32>} : memref<4x256xf32, #tpu.memory_space<vmem>>, vector<4x256xf32>,
    return
  }
  func.func @transform_0(%arg0: i32, %arg1: i32) -> (i32, i32) {
    %c0_i32 = arith.constant 0 : i32
    return %arg0, %arg1 : i32, i32
  }
  func.func @transform_1(%arg0: i32, %arg1: i32) -> (i32, i32) {
    %c0_i32 = arith.constant 0 : i32
    %c0_i32_0 = arith.constant 0 : i32
    return %c0_i32, %arg1 : i32, i32
  }
  func.func @transform_2(%arg0: i32, %arg1: i32) -> (i32, i32) {
    %c0_i32 = arith.constant 0 : i32
    return %arg0, %arg1 : i32, i32
  }
}

</mosaic_0001>

<llo_original>
// kernel: tpu_custom_call.1
$region0: #{tpu_custom_call.1}
  #allocation0 [shape = 'u32[]', space=smem, size = 0x4, offset = 0x4, fixed_abs, tag = 'smem constant byte address 0x4 - core index']
  #allocation1 [shape = 'u32[144,128]{1,0:T(1,128)}', space=vmem, size = 0x12000, scoped, tag = 'internal scratch']
  %s0 = inlined_call_operand.hbm [shape: f32[4,256], index: 0, kind: input, shape index: {}]
  %s1 = inlined_call_operand.vmem [shape: f32[1,256], index: 1, kind: input, shape index: {}]
  %s2 = inlined_call_operand.hbm [shape: f32[4,256], index: 2, kind: output, shape index: {}]
  %s3 = sld [smem:[#allocation0]]
  $region22: #{tpu_custom_call.1} parent=0
    _
  %s5 = ssub.s32 1, %s3
  %s6 = scalar_select 0, %s5, %s3
  $region1: #{tpu_custom_call.1} parent=0
    #allocation2 [shape = 'u8[4096]{0}', space=vmem, size = 0x1000, scoped, tag = 'input window, operand 0, single buffered']
    #allocation3 [shape = 's32[1]{0}', space=sflag, size = 0x4, scoped, tag = 'scoped memory for tpu_custom_call.1']
    #allocation4 [shape = 's32[1]{0}', space=sflag, size = 0x4, scoped, tag = 'scoped memory for tpu_custom_call.1']
    #allocation5 [shape = 'u8[4096]{0}', space=vmem, size = 0x1000, scoped, tag = 'output window, operand 0, single buffered']
    %7 = vsyncpa [#allocation3], 0
    %8 = vsyncpa [#allocation4], 0
    // Predicated region
    $region2: #{tpu_custom_call.1} parent=1 // pred_check
      _
    $region3: #{tpu_custom_call.1} parent=1 // pred_check_branch
      %10 = sbr.rel (0) target = $region5
    $region4: #{tpu_custom_call.1} parent=1 // pred_region
      %s12 = ssub.s32 128, 128
      %13 = vsyncadd [#allocation3], %s12
      %s15 = sshll.u32 [#allocation2], 4
      %s16 = int_to_ptr.vmem [resolvable:$true] %s15
      %18 = dma.hbm_to_vmem [thread:$0]  %s0, 128, %s16, [#allocation3]
    $region5: #{tpu_custom_call.1} parent=1 // pred_fallthru
      _
    // Predicated region
    $region6: #{tpu_custom_call.1} parent=1 // pred_check
      _
    $region7: #{tpu_custom_call.1} parent=1 // pred_check_branch
      %20 = sbr.rel (0) target = $region9
    $region8: #{tpu_custom_call.1} parent=1 // pred_region
      _
    $region9: #{tpu_custom_call.1} parent=1 // pred_fallthru
      _
    // Predicated region
    $region10: #{tpu_custom_call.1} parent=1 // pred_check
      _
    $region11: #{tpu_custom_call.1} parent=1 // pred_check_branch
      %22 = sbr.rel (0) target = $region13
    $region12: #{tpu_custom_call.1} parent=1 // pred_region
      %23 = dma.done [#allocation3], 128
    $region13: #{tpu_custom_call.1} parent=1 // pred_fallthru
      _
    %v24 = vld [vmem:[#allocation2] sm:$0xff]
    %v25 = vld [vmem:[%s1] sm:$0x3]
    %v27 = vlaneseq
    %v28 = vshrl.u32 %v27, 7
    %v29 = vsub.s32 0, %v28
    %v30 = vrot.slane %v25, %v29
    %v31 = vlaneseq
    %v32 = vshrl.u32 %v31, 7
    %v33 = vsub.s32 1, %v32
    %v34 = vrot.slane %v25, %v33
    %v35 = vcombine.low %v30, %v34
    %v37 = vadd.f32 %v24, %v35
    %38 = vst [vmem:[#allocation5] sm:$0xff] %v37
    // Predicated region
    $region14: #{tpu_custom_call.1} parent=1 // pred_check
      _
    $region15: #{tpu_custom_call.1} parent=1 // pred_check_branch
      %40 = sbr.rel (0) target = $region17
    $region16: #{tpu_custom_call.1} parent=1 // pred_region
      %s42 = ssub.s32 128, 128
      %43 = vsyncadd [#allocation4], %s42
      %s45 = sshll.u32 [#allocation5], 4
      %s46 = int_to_ptr.vmem [resolvable:$true] %s45
      %48 = dma.vmem_to_hbm [thread:$0]  %s46, 128, %s2, [#allocation4]
    $region17: #{tpu_custom_call.1} parent=1 // pred_fallthru
      _
    // Predicated region
    $region18: #{tpu_custom_call.1} parent=1 // pred_check
      _
    $region19: #{tpu_custom_call.1} parent=1 // pred_check_branch
      %50 = sbr.rel (0) target = $region21
    $region20: #{tpu_custom_call.1} parent=1 // pred_region
      %51 = dma.done [#allocation4], 128
    $region21: #{tpu_custom_call.1} parent=1 // pred_fallthru
      _
    %52 = vsyncpa [#allocation3], 1
    %53 = vsyncpa [#allocation4], 1

</llo_original>
